<compile_context>
chip_gen: v6e
topology: v6e:2x2x1
jax: 0.10.0
libtpu: 0.0.40
codegen_flags: <defaults>
</compile_context>

<pallas_src>
import functools

import jax
import jax.numpy as jnp
from jax.experimental import pallas as pl
from jax.experimental.pallas import tpu as pltpu

_LANE = 128
_MIN_STEPS = 2  # keep both v7x TensorCores busy (v5e/v6e are single-TC)


# ------------------------------ Pallas kernel -------------------------------

def _layernorm_nchw_kernel(x_ref, g_ref, b_ref, o_ref, *, eps, inv_c):
    # x_ref block: (bB, C, bl)   g_ref/b_ref: (1, C, 1) f32
    x = x_ref[...].astype(jnp.float32)                  # compute in f32 always
    s = jnp.sum(x, axis=1, keepdims=True)               # (bB, 1, bl)
    ss = jnp.sum(x * x, axis=1, keepdims=True)          # (bB, 1, bl)
    mean = s * inv_c
    # biased variance (nn.LayerNorm); clamp cancellation so rsqrt never sees <0
    var = jnp.maximum(ss * inv_c - mean * mean, 0.0)
    inv = jax.lax.rsqrt(var + eps)
    # TODO(synk): if a v7x bundle dump ever shows VALU binding, offload the two
    # channel sums to the idle MXU via ones(1,C) @ x / ones(1,C) @ (x*x).
    o_ref[...] = ((x - mean) * inv * g_ref[...] + b_ref[...]).astype(o_ref.dtype)


# ------------------------------ tiling policy --------------------------------

def _sublane_multiple(itemsize):
    # f32 -> 8, bf16/f16 -> 16, int8/fp8 -> 32 (sub-32-bit packs along sublanes)
    return max(8, 32 // max(1, itemsize))


def _vmem_params():
    """(tile budget, scoped vmem limit) in bytes, generation-aware."""
    try:
        phys = pltpu.get_tpu_info().vmem_capacity_bytes
    except Exception:  # no TPU info available -> assume smallest (v7x, 64 MiB)
        phys = 64 << 20
    # ~21 MiB on v7x (64 MiB physical), 32 MiB on v5e/v6e (128 MiB physical)
    budget = min(phys // 3, 32 << 20)
    budget = max(1 << 20, budget - (1 << 20))          # headroom for gamma/beta etc.
    limit = min(phys * 3 // 4, budget + (8 << 20))     # raise default scoped limit
    return budget, limit


def _choose_tiling(B, C, L_pad, in_itemsize, out_itemsize, budget_bytes):
    c_in = -(-C // _sublane_multiple(in_itemsize)) * _sublane_multiple(in_itemsize)
    c_out = -(-C // _sublane_multiple(out_itemsize)) * _sublane_multiple(out_itemsize)
    # double-buffered (in + out) VMEM bytes per (batch-row x lane) column
    per_col = 2 * (c_in * in_itemsize + c_out * out_itemsize)

    # 1) maximize the lane block under the budget (bB = 1)
    bl = max(_LANE, min(L_pad, (budget_bytes // per_col) // _LANE * _LANE))

    # 2) spend leftover budget on batch rows (amortizes per-step overhead and
    #    strided-row DMA setup when C is tiny); keep bB a divisor of B
    bB = 1
    for d in range(B, 0, -1):
        if B % d == 0 and d * bl * per_col <= budget_bytes:
            bB = d
            break

    # 3) guarantee >= _MIN_STEPS grid steps so both v7x TCs get work
    def nsteps(bb, blk):
        return (B // bb) * pl.cdiv(L_pad, blk)

    if nsteps(bB, bl) < _MIN_STEPS:
        if L_pad // _LANE >= _MIN_STEPS:
            bl = _LANE * pl.cdiv(L_pad // _LANE, _MIN_STEPS)
        elif bB > 1:
            bB = max(1, bB // _MIN_STEPS)
            while B % bB:
                bB -= 1
    return bB, bl


# ------------------------------ wrapper --------------------------------------

def layernorm_nchw(x_nchw, gamma, beta, eps=1e-5):
    """nn.LayerNorm(C) applied over the channel dim of an NCHW tensor
    (equivalent to to_4d(LayerNorm(to_3d(x)), h, w))."""
    B, C, H, W = x_nchw.shape
    L = H * W
    L_pad = max(_LANE, -(-L // _LANE) * _LANE)
    out_dtype = x_nchw.dtype

    x3 = x_nchw.reshape(B, C, L)                       # free reshape (contiguous)
    if L_pad != L:
        x3 = jnp.pad(x3, ((0, 0), (0, 0), (0, L_pad - L)))

    budget, vmem_limit = _vmem_params()
    in_isz = jnp.dtype(x_nchw.dtype).itemsize
    out_isz = jnp.dtype(out_dtype).itemsize
    bB, bl = _choose_tiling(B, C, L_pad, in_isz, out_isz, budget)

    cost = pl.CostEstimate(
        flops=9 * B * C * L_pad,
        transcendentals=B * L_pad,
        bytes_accessed=B * C * L_pad * (in_isz + out_isz) + 2 * C * 4,
    )

    kern = functools.partial(_layernorm_nchw_kernel, eps=eps, inv_c=1.0 / C)
    y3 = pl.pallas_call(
        kern,
        out_shape=jax.ShapeDtypeStruct((B, C, L_pad), out_dtype),
        grid=(B // bB, pl.cdiv(L_pad, bl)),
        in_specs=[
            pl.BlockSpec((bB, C, bl), lambda b, i: (b, 0, i)),
            pl.BlockSpec((1, C, 1), lambda b, i: (0, 0, 0)),
            pl.BlockSpec((1, C, 1), lambda b, i: (0, 0, 0)),
        ],
        out_specs=pl.BlockSpec((bB, C, bl), lambda b, i: (b, 0, i)),
        compiler_params=pltpu.CompilerParams(
            dimension_semantics=("parallel", "parallel"),
            vmem_limit_bytes=int(vmem_limit)),
        cost_estimate=cost,
    )(x3,
      gamma.reshape(1, C, 1).astype(jnp.float32),
      beta.reshape(1, C, 1).astype(jnp.float32))

    if L_pad != L:
        y3 = y3[:, :, :L]
    return y3.reshape(B, C, H, W)


# ------------------------------ reference ------------------------------------

def _layernorm_ref(x_nchw, gamma, beta, eps=1e-5):
    # mirrors: to_4d(nn.LayerNorm(C)(to_3d(x)), h, w)
    xt = jnp.transpose(x_nchw, (0, 2, 3, 1)).astype(jnp.float32)   # (B, H, W, C)
    m = jnp.mean(xt, axis=-1, keepdims=True)
    v = jnp.mean((xt - m) ** 2, axis=-1, keepdims=True)
    y = (xt - m) * jax.lax.rsqrt(v + eps) * gamma + beta
    return jnp.transpose(y, (0, 3, 1, 2)).astype(x_nchw.dtype)


# ------------------------------ main ------------------------------------------

if __name__ == "__main__":
    key = jax.random.PRNGKey(0)
    kx, kg, kb, kx2 = jax.random.split(key, 4)

    # main shape: B=2, C=4, H=W=16 -> L=256 (lane-dense; >=2 grid steps for v7x)
    B, C, H, W = 2, 4, 16, 16
    x = jax.random.normal(kx, (B, C, H, W), jnp.float32)
    gamma = 1.0 + 0.1 * jax.random.normal(kg, (C,), jnp.float32)
    beta = 0.1 * jax.random.normal(kb, (C,), jnp.float32)

    fn = jax.jit(layernorm_nchw)
    y = fn(x, gamma, beta)
    jax.block_until_ready(y)
    assert y.shape == (B, C, H, W) and y.dtype == x.dtype
    y_ref = _layernorm_ref(x, gamma, beta)
    assert jnp.allclose(y, y_ref, atol=1e-4, rtol=1e-4), "mismatch vs reference"

    # non-128-divisible spatial path: L=36 padded to 128 lanes, sliced back
    x2 = jax.random.normal(kx2, (1, C, 6, 6), jnp.float32)
    y2 = jax.jit(layernorm_nchw)(x2, gamma, beta)
    jax.block_until_ready(y2)
    assert y2.shape == (1, C, 6, 6)
    assert jnp.allclose(y2, _layernorm_ref(x2, gamma, beta), atol=1e-4, rtol=1e-4)

    print("KERNEL_OK")
</pallas_src>

<mosaic_0001>
module attributes {stable_mosaic.version = 11 : i64} {
  func.func @_layernorm_nchw_kernel(%arg0: i32, %arg1: i32, %arg2: memref<2x4x128xf32, #tpu.memory_space<vmem>>, %arg3: memref<1x4x1xf32, #tpu.memory_space<vmem>>, %arg4: memref<1x4x1xf32, #tpu.memory_space<vmem>>, %arg5: memref<2x4x128xf32, #tpu.memory_space<vmem>>) attributes {dimension_semantics = [#tpu.dimension_semantics<parallel>, #tpu.dimension_semantics<parallel>], iteration_bounds = array<i64: 1, 2>, scalar_prefetch = 0 : i64, scratch_operands = 0 : i64, tpu.core_type = #tpu.core_type<tc>, window_params = [{transform_indices = @transform_0, window_bounds = array<i64: 2, 4, 128>}, {pipeline_mode = #tpu.pipeline_mode<synchronous>, transform_indices = @transform_1, window_bounds = array<i64: 1, 4, 1>}, {pipeline_mode = #tpu.pipeline_mode<synchronous>, transform_indices = @transform_2, window_bounds = array<i64: 1, 4, 1>}, {transform_indices = @transform_3, window_bounds = array<i64: 2, 4, 128>}]} {
    %c0 = arith.constant 0 : index
    %c0_0 = arith.constant 0 : index
    %c0_1 = arith.constant 0 : index
    %0 = vector.load %arg2[%c0, %c0_0, %c0_1] : memref<2x4x128xf32, #tpu.memory_space<vmem>>, vector<2x4x128xf32>
    %cst = arith.constant dense<0.000000e+00> : vector<2x128xf32>
    %1 = vector.multi_reduction <add>, %0, %cst [1] : vector<2x4x128xf32> to vector<2x128xf32>
    %2 = vector.shape_cast %1 : vector<2x128xf32> to vector<2x1x128xf32>
    %3 = arith.mulf %0, %0 : vector<2x4x128xf32>
    %cst_2 = arith.constant dense<0.000000e+00> : vector<2x128xf32>
    %4 = vector.multi_reduction <add>, %3, %cst_2 [1] : vector<2x4x128xf32> to vector<2x128xf32>
    %5 = vector.shape_cast %4 : vector<2x128xf32> to vector<2x1x128xf32>
    %cst_3 = arith.constant 2.500000e-01 : f32
    %6 = vector.broadcast %cst_3 : f32 to vector<2x1x128xf32>
    %7 = arith.mulf %2, %6 : vector<2x1x128xf32>
    %cst_4 = arith.constant 2.500000e-01 : f32
    %8 = vector.broadcast %cst_4 : f32 to vector<2x1x128xf32>
    %9 = arith.mulf %5, %8 : vector<2x1x128xf32>
    %10 = arith.mulf %7, %7 : vector<2x1x128xf32>
    %11 = arith.subf %9, %10 : vector<2x1x128xf32>
    %cst_5 = arith.constant 0.000000e+00 : f32
    %12 = vector.broadcast %cst_5 : f32 to vector<2x1x128xf32>
    %13 = arith.maximumf %11, %12 : vector<2x1x128xf32>
    %cst_6 = arith.constant 9.99999974E-6 : f32
    %14 = vector.broadcast %cst_6 : f32 to vector<2x1x128xf32>
    %15 = arith.addf %13, %14 : vector<2x1x128xf32>
    %16 = math.rsqrt %15 : vector<2x1x128xf32>
    %17 = vector.broadcast %7 : vector<2x1x128xf32> to vector<2x4x128xf32>
    %18 = arith.subf %0, %17 : vector<2x4x128xf32>
    %19 = vector.broadcast %16 : vector<2x1x128xf32> to vector<2x4x128xf32>
    %20 = arith.mulf %18, %19 : vector<2x4x128xf32>
    %c0_7 = arith.constant 0 : index
    %c0_8 = arith.constant 0 : index
    %c0_9 = arith.constant 0 : index
    %21 = vector.load %arg3[%c0_7, %c0_8, %c0_9] : memref<1x4x1xf32, #tpu.memory_space<vmem>>, vector<1x4x1xf32>
    %22 = vector.broadcast %21 : vector<1x4x1xf32> to vector<2x4x128xf32>
    %23 = arith.mulf %20, %22 : vector<2x4x128xf32>
    %c0_10 = arith.constant 0 : index
    %c0_11 = arith.constant 0 : index
    %c0_12 = arith.constant 0 : index
    %24 = vector.load %arg4[%c0_10, %c0_11, %c0_12] : memref<1x4x1xf32, #tpu.memory_space<vmem>>, vector<1x4x1xf32>
    %25 = vector.broadcast %24 : vector<1x4x1xf32> to vector<2x4x128xf32>
    %26 = arith.addf %23, %25 : vector<2x4x128xf32>
    %c0_13 = arith.constant 0 : index
    %c0_14 = arith.constant 0 : index
    %c0_15 = arith.constant 0 : index
    %27 = vector.load %arg5[%c0_13, %c0_14, %c0_15] : memref<2x4x128xf32, #tpu.memory_space<vmem>>, vector<2x4x128xf32>
    tpu.vector_store %arg5[%c0_13, %c0_14, %c0_15], %26 {strides = array<i32>} : memref<2x4x128xf32, #tpu.memory_space<vmem>>, vector<2x4x128xf32>,
    return
  }
  func.func @transform_0(%arg0: i32, %arg1: i32) -> (i32, i32, i32) {
    %c0_i32 = arith.constant 0 : i32
    %c0_i32_0 = arith.constant 0 : i32
    return %arg0, %c0_i32, %arg1 : i32, i32, i32
  }
  func.func @transform_1(%arg0: i32, %arg1: i32) -> (i32, i32, i32) {
    %c0_i32 = arith.constant 0 : i32
    %c0_i32_0 = arith.constant 0 : i32
    %c0_i32_1 = arith.constant 0 : i32
    %c0_i32_2 = arith.constant 0 : i32
    return %c0_i32, %c0_i32_0, %c0_i32_1 : i32, i32, i32
  }
  func.func @transform_2(%arg0: i32, %arg1: i32) -> (i32, i32, i32) {
    %c0_i32 = arith.constant 0 : i32
    %c0_i32_0 = arith.constant 0 : i32
    %c0_i32_1 = arith.constant 0 : i32
    %c0_i32_2 = arith.constant 0 : i32
    return %c0_i32, %c0_i32_0, %c0_i32_1 : i32, i32, i32
  }
  func.func @transform_3(%arg0: i32, %arg1: i32) -> (i32, i32, i32) {
    %c0_i32 = arith.constant 0 : i32
    %c0_i32_0 = arith.constant 0 : i32
    return %arg0, %c0_i32, %arg1 : i32, i32, i32
  }
}

</mosaic_0001>

<llo_original>
// kernel: layernorm_nchw.1
$region0: #{layernorm_nchw.1}
  #allocation0 [shape = 'u32[]', space=smem, size = 0x4, offset = 0x4, fixed_abs, tag = 'smem constant byte address 0x4 - core index']
  #allocation1 [shape = 'u32[144,128]{1,0:T(1,128)}', space=vmem, size = 0x12000, scoped, tag = 'internal scratch']
  %s0 = inlined_call_operand.vmem [shape: f32[2,4,256], index: 0, kind: input, shape index: {}]
  %s1 = inlined_call_operand.vmem [shape: f32[1,4,1], index: 1, kind: input, shape index: {}]
  %s2 = inlined_call_operand.vmem [shape: f32[1,4,1], index: 2, kind: input, shape index: {}]
  %s3 = inlined_call_operand.vmem [shape: f32[2,4,256], index: 3, kind: output, shape index: {}]
  %s4 = sld [smem:[#allocation0]]
  $region123: #{layernorm_nchw.1} parent=0
    _
  %s6 = ssub.s32 1, %s4
  %s7 = scalar_select 0, %s6, %s4
  $region1: #{layernorm_nchw.1} parent=0
    #allocation2 [shape = 'u8[8192]{0}', space=vmem, size = 0x2000, scoped, tag = 'input window, operand 0']
    #allocation3 [shape = 'u8[8192]{0}', space=vmem, size = 0x2000, scoped, tag = 'output window, operand 0']
    loop: start=0, step=1, limit=4
    $region2: #{layernorm_nchw.1} parent=1 // loop_pre_header
      _
    $region3: #{layernorm_nchw.1} parent=1 // loop_header
      %s9 = sphi 0, %s13
      %p10 = scmp.ge.s32.totalorder %s9, 4
      %s16 = sphi 0, %s28
      %s17 = sphi 0, %s24
      %s18 = sphi 0, %s16
      %s19 = sphi 0, %s17
      %s20 = sphi 0, %s18
      %s21 = sphi 0, %s19
      %s33 = sphi 0, %s35
      %s36 = sphi 0, %s33
      %s37 = sphi 0, %s36
      %s53 = sphi 0, %s37
      %s57 = sphi 0, %s57
      %s59 = sphi 0, %s57
      %s60 = sphi 0, %s59
      %s74 = sphi 0, %s60
      %s78 = sphi 0, %s78
      %s80 = sphi 0, %s78
      %s81 = sphi 0, %s80
      %s95 = sphi 0, %s81
      %s103 = sphi 0, %s105
      %s106 = sphi 0, %s103
      %s107 = sphi 0, %s106
      %s123 = sphi 0, %s107
    $region4: #{layernorm_nchw.1} parent=1 // loop_header_branch
      %12 = sbr.rel (%p10) target = $region8
    $region5: #{layernorm_nchw.1} parent=1 // loop_body
      %s14 = ssub.s32 %s9, 1
      %s15 = ssub.s32 %s9, 2
      %s22 = sadd.s32 1, %s17
      %p23 = scmp.ge.s32.totalorder %s22, 2
      %s24 = scalar_select %p23, 0, %s22
      %s25 = sadd.s32 1, %s16
      %s26 = scalar_select %p23, %s25, %s16
      %p27 = scmp.ge.s32.totalorder %s26, 1
      %s28 = scalar_select %p27, 0, %s26
      %s29 = ssub.s32 %s16, %s28
      %s30 = ssub.s32 %s17, %s24
      %s31 = sor.u32 %s29, %s30
      %p32 = scmp.eq.s32.totalorder %s31, 0
      %s34 = sadd.s32 %s33, 1
      %s35 = scalar_select %p32, %s33, %s34
      %p38 = pneg %p32
      %p39 = scmp.eq.s32.totalorder %s9, 1
      %p40 = por %p38, %p39
      %p41 = scmp.ne.s32.totalorder %s33, %s36
      %p42 = scmp.eq.s32.totalorder %s9, 0
      %p43 = por %p41, %p42
      %p44 = scmp.ne.s32.totalorder %s33, %s36
      %p45 = scmp.eq.s32.totalorder %s14, 1
      %p46 = por %p44, %p45
      %p47 = scmp.ne.s32.totalorder %s36, %s37
      %p48 = scmp.eq.s32.totalorder %s14, 0
      %p49 = por %p47, %p48
      %p50 = scmp.ne.s32.totalorder %s36, %s37
      %p51 = scmp.eq.s32.totalorder %s15, 1
      %p52 = por %p50, %p51
      %p54 = scmp.ne.s32.totalorder %s37, %s53
      %p55 = scmp.eq.s32.totalorder %s15, 0
      %p56 = por %p54, %p55
      %s58 = sadd.s32 %s57, 1
      %p61 = scmp.eq.s32.totalorder %s9, 1
      %p62 = scmp.ne.s32.totalorder %s57, %s59
      %p63 = scmp.eq.s32.totalorder %s9, 0
      %p64 = por %p62, %p63
      %p65 = scmp.ne.s32.totalorder %s57, %s59
      %p66 = scmp.eq.s32.totalorder %s14, 1
      %p67 = por %p65, %p66
      %p68 = scmp.ne.s32.totalorder %s59, %s60
      %p69 = scmp.eq.s32.totalorder %s14, 0
      %p70 = por %p68, %p69
      %p71 = scmp.ne.s32.totalorder %s59, %s60
      %p72 = scmp.eq.s32.totalorder %s15, 1
      %p73 = por %p71, %p72
      %p75 = scmp.ne.s32.totalorder %s60, %s74
      %p76 = scmp.eq.s32.totalorder %s15, 0
      %p77 = por %p75, %p76
      %s79 = sadd.s32 %s78, 1
      %p82 = scmp.eq.s32.totalorder %s9, 1
      %p83 = scmp.ne.s32.totalorder %s78, %s80
      %p84 = scmp.eq.s32.totalorder %s9, 0
      %p85 = por %p83, %p84
      %p86 = scmp.ne.s32.totalorder %s78, %s80
      %p87 = scmp.eq.s32.totalorder %s14, 1
      %p88 = por %p86, %p87
      %p89 = scmp.ne.s32.totalorder %s80, %s81
      %p90 = scmp.eq.s32.totalorder %s14, 0
      %p91 = por %p89, %p90
      %p92 = scmp.ne.s32.totalorder %s80, %s81
      %p93 = scmp.eq.s32.totalorder %s15, 1
      %p94 = por %p92, %p93
      %p96 = scmp.ne.s32.totalorder %s81, %s95
      %p97 = scmp.eq.s32.totalorder %s15, 0
      %p98 = por %p96, %p97
      %s99 = ssub.s32 %s16, %s28
      %s100 = ssub.s32 %s17, %s24
      %s101 = sor.u32 %s99, %s100
      %p102 = scmp.eq.s32.totalorder %s101, 0
      %s104 = sadd.s32 %s103, 1
      %s105 = scalar_select %p102, %s103, %s104
      %p108 = pneg %p102
      %p109 = scmp.eq.s32.totalorder %s9, 1
      %p110 = por %p108, %p109
      %p111 = scmp.ne.s32.totalorder %s103, %s106
      %p112 = scmp.eq.s32.totalorder %s9, 0
      %p113 = por %p111, %p112
      %p114 = scmp.ne.s32.totalorder %s103, %s106
      %p115 = scmp.eq.s32.totalorder %s14, 1
      %p116 = por %p114, %p115
      %p117 = scmp.ne.s32.totalorder %s106, %s107
      %p118 = scmp.eq.s32.totalorder %s14, 0
      %p119 = por %p117, %p118
      %p120 = scmp.ne.s32.totalorder %s106, %s107
      %p121 = scmp.eq.s32.totalorder %s15, 1
      %p122 = por %p120, %p121
      %p124 = scmp.ne.s32.totalorder %s107, %s123
      %p125 = scmp.eq.s32.totalorder %s15, 0
      %p126 = por %p124, %p125
      %p127 = scmp.le.s32.totalorder 1, %s9
      %p128 = scmp.lt.s32.totalorder %s9, 3
      %p129 = pnand %p127, %p128
      %p130 = pneg %p129
      // Predicated region
      $region9: #{layernorm_nchw.1} parent=5 // pred_check
        _
      $region10: #{layernorm_nchw.1} parent=5 // pred_check_branch
        %132 = sbr.rel (%p129) target = $region12
      $region11: #{layernorm_nchw.1} parent=5 // pred_region
        %s133 = ssub.s32 %s9, 1
        // Predicated region
        $region13: #{layernorm_nchw.1} parent=11 // pred_check
          %p134 = pneg %p70
        $region14: #{layernorm_nchw.1} parent=11 // pred_check_branch
          %136 = sbr.rel (%p134) target = $region16
        $region15: #{layernorm_nchw.1} parent=11 // pred_region
          _
        $region16: #{layernorm_nchw.1} parent=11 // pred_fallthru
          _
        // Predicated region
        $region17: #{layernorm_nchw.1} parent=11 // pred_check
          %p137 = pneg %p91
        $region18: #{layernorm_nchw.1} parent=11 // pred_check_branch
          %139 = sbr.rel (%p137) target = $region20
        $region19: #{layernorm_nchw.1} parent=11 // pred_region
          _
        $region20: #{layernorm_nchw.1} parent=11 // pred_fallthru
          _
      $region12: #{layernorm_nchw.1} parent=5 // pred_fallthru
        _
      %p140 = scmp.lt.s32.totalorder %s9, 2
      // Predicated region
      $region21: #{layernorm_nchw.1} parent=5 // pred_check
        %p141 = pneg %p140
      $region22: #{layernorm_nchw.1} parent=5 // pred_check_branch
        %143 = sbr.rel (%p141) target = $region24
      $region23: #{layernorm_nchw.1} parent=5 // pred_region
        // Predicated region
        $region25: #{layernorm_nchw.1} parent=23 // pred_check
          %p144 = pneg %p43
        $region26: #{layernorm_nchw.1} parent=23 // pred_check_branch
          %146 = sbr.rel (%p144) target = $region28
        $region27: #{layernorm_nchw.1} parent=23 // pred_region
          %s147 = sand.u32 %s33, 1
          %s148 = sand.u32 %s33, 1
          %s149 = smul.addr %s148, 8
          %s150 = scalar_lea.vmem [#allocation2], %s149
          %s151 = smul.u32 2, %s16
          %s152 = smul.addr %s151, 2
          %s153 = sadd.s32 %s17, %s152
          %s154 = smul.addr %s153, 4
          %s155 = scalar_lea.vmem %s0, %s154
          // Predicated region
          $region29: #{layernorm_nchw.1} parent=27 // pred_check
            _
          $region30: #{layernorm_nchw.1} parent=27 // pred_check_branch
            %157 = sbr.rel (0) target = $region32
          $region31: #{layernorm_nchw.1} parent=27 // pred_region
            // Predicated region
            $region33: #{layernorm_nchw.1} parent=31 // pred_check
              _
            $region34: #{layernorm_nchw.1} parent=31 // pred_check_branch
              %159 = sbr.rel target = $region36
            $region35: #{layernorm_nchw.1} parent=31 // pred_region
              // Predicated region
              $region48: #{layernorm_nchw.1} parent=35 // pred_check
                _
              $region49: #{layernorm_nchw.1} parent=35 // pred_check_branch
                %177 = sbr.rel (0) target = $region51
              $region50: #{layernorm_nchw.1} parent=35 // pred_region
                loop: start=0, step=1, limit=1
                $region52: #{layernorm_nchw.1} parent=50 // loop_pre_header
                  _
                $region53: #{layernorm_nchw.1} parent=50 // loop_header
                  %s179 = sphi 0, %s183
                  %p180 = scmp.ge.s32.totalorder %s179, 1
                  %s184 = sphi %s155, %s155
                  %s185 = sphi %s150, %s150
                $region54: #{layernorm_nchw.1} parent=50 // loop_header_branch
                  %182 = sbr.rel (%p180) target = $region58
                $region55: #{layernorm_nchw.1} parent=50 // loop_body
                  _
                $region56: #{layernorm_nchw.1} parent=50 // loop_footer
                  %s183 = sadd.s32 1, %s179
                $region57: #{layernorm_nchw.1} parent=50 // loop_footer_branch
                  %178 = sbr.rel target = $region53
                $region58: #{layernorm_nchw.1} parent=50 // loop_exit
                  _
                %s187 = ssub.s32 16, 1
                loop: start=0, step=1, limit=1
                $region59: #{layernorm_nchw.1} parent=50 // loop_pre_header
                  _
                $region60: #{layernorm_nchw.1} parent=50 // loop_header
                  %s189 = sphi 0, %s193
                  %p190 = scmp.ge.s32.totalorder %s189, 1
                  %s194 = sphi %s155, %s155
                  %s195 = sphi %s150, %s150
                $region61: #{layernorm_nchw.1} parent=50 // loop_header_branch
                  %192 = sbr.rel (%p190) target = $region65
                $region62: #{layernorm_nchw.1} parent=50 // loop_body
                  %v196 = vld [vmem:[%s194] sm:%s187]
                  %197 = vst [vmem:[%s195] sm:%s187] %v196
                  %v198 = vld [vmem:[%s194 + $0x8] sm:%s187]
                  %199 = vst [vmem:[%s195 + $0x4] sm:%s187] %v198
                $region63: #{layernorm_nchw.1} parent=50 // loop_footer
                  %s193 = sadd.s32 1, %s189
                $region64: #{layernorm_nchw.1} parent=50 // loop_footer_branch
                  %188 = sbr.rel target = $region60
                $region65: #{layernorm_nchw.1} parent=50 // loop_exit
                  _
              $region51: #{layernorm_nchw.1} parent=35 // pred_fallthru
                _
            $region36: #{layernorm_nchw.1} parent=31 // pred_fallthru
              _
            // Predicated region
            $region37: #{layernorm_nchw.1} parent=31 // pred_check
              _
            $region38: #{layernorm_nchw.1} parent=31 // pred_check_branch
              %161 = sbr.rel (0) target = $region40
            $region39: #{layernorm_nchw.1} parent=31 // pred_region
              %s163 = ssub.s32 16, 1
              loop: start=0, step=1, limit=1
              $region41: #{layernorm_nchw.1} parent=39 // loop_pre_header
                _
              $region42: #{layernorm_nchw.1} parent=39 // loop_header
                %s165 = sphi 0, %s169
                %p166 = scmp.ge.s32.totalorder %s165, 1
                %s170 = sphi %s155, %s155
                %s171 = sphi %s150, %s150
              $region43: #{layernorm_nchw.1} parent=39 // loop_header_branch
                %168 = sbr.rel (%p166) target = $region47
              $region44: #{layernorm_nchw.1} parent=39 // loop_body
                %v172 = vld [vmem:[%s170] sm:%s163]
                %173 = vst [vmem:[%s171] sm:%s163] %v172
                %v174 = vld [vmem:[%s170 + $0x8] sm:%s163]
                %175 = vst [vmem:[%s171 + $0x4] sm:%s163] %v174
              $region45: #{layernorm_nchw.1} parent=39 // loop_footer
                %s169 = sadd.s32 1, %s165
              $region46: #{layernorm_nchw.1} parent=39 // loop_footer_branch
                %164 = sbr.rel target = $region42
              $region47: #{layernorm_nchw.1} parent=39 // loop_exit
                _
            $region40: #{layernorm_nchw.1} parent=31 // pred_fallthru
              _
          $region32: #{layernorm_nchw.1} parent=27 // pred_fallthru
            _
          %200 = vnop
        $region28: #{layernorm_nchw.1} parent=23 // pred_fallthru
          _
      $region24: #{layernorm_nchw.1} parent=5 // pred_fallthru
        _
      %p201 = scmp.le.s32.totalorder 1, %s9
      %p202 = scmp.lt.s32.totalorder %s9, 3
      %p203 = pnand %p201, %p202
      %p204 = pneg %p203
      // Predicated region
      $region66: #{layernorm_nchw.1} parent=5 // pred_check
        _
      $region67: #{layernorm_nchw.1} parent=5 // pred_check_branch
        %206 = sbr.rel (%p203) target = $region69
      $region68: #{layernorm_nchw.1} parent=5 // pred_region
        %s207 = ssub.s32 %s9, 1
        %s208 = sand.u32 %s36, 1
        %s209 = sand.u32 %s36, 1
        %s210 = smul.addr %s209, 8
        %s211 = scalar_lea.vmem [#allocation2], %s210
        // Predicated region
        $region70: #{layernorm_nchw.1} parent=68 // pred_check
          %p212 = pneg %p49
        $region71: #{layernorm_nchw.1} parent=68 // pred_check_branch
          %214 = sbr.rel (%p212) target = $region73
        $region72: #{layernorm_nchw.1} parent=68 // pred_region
          _
        $region73: #{layernorm_nchw.1} parent=68 // pred_fallthru
          _
        %s215 = sand.u32 %s36, 1
        %s216 = sand.u32 %s36, 1
        %s217 = smul.addr %s216, 8
        %s218 = scalar_lea.vmem [#allocation2], %s217
        %p219 = pneg %p49
        %p220 = pneg %p46
        %p221 = pneg %p70
        %p222 = pneg %p67
        %p223 = pneg %p91
        %p224 = pneg %p88
        %p225 = pneg %p119
        %p226 = pneg %p116
        %s227 = sand.u32 %s106, 1
        %s228 = sand.u32 %s106, 1
        %s229 = smul.addr %s228, 8
        %s230 = scalar_lea.vmem [#allocation3], %s229
        %s231 = smul.u32 2, %s18
        %s232 = smul.u32 2, %s18
        %v233 = vld [vmem:[%s211] sm:$0xf]
        %v234 = vld [vmem:[%s211 + $0x4] sm:$0xf]
        %vm235 = vcmask 1043456
        %v236 = vsel %vm235, %v233, 0.0
        %v237 = vrot.slane %v236, 4
        %v238 = vadd.f32 %v236, %v237
        %v239 = vrot.slane %v238, 2
        %v240 = vadd.f32 %v238, %v239
        %v241 = vrot.slane %v240, 1
        %v242 = vadd.f32 %v240, %v241
        %v243 = vsel %vm235, %v234, 0.0
        %v244 = vrot.slane %v243, 4
        %v245 = vadd.f32 %v243, %v244
        %v246 = vrot.slane %v245, 2
        %v247 = vadd.f32 %v245, %v246
        %v248 = vrot.slane %v247, 1
        %v249 = vadd.f32 %v247, %v248
        %v250 = vmul.f32 %v233, %v233
        %v251 = vmul.f32 %v234, %v234
        %v252 = vsel %vm235, %v250, 0.0
        %v253 = vrot.slane %v252, 4
        %v254 = vadd.f32 %v252, %v253
        %v255 = vrot.slane %v254, 2
        %v256 = vadd.f32 %v254, %v255
        %v257 = vrot.slane %v256, 1
        %v258 = vadd.f32 %v256, %v257
        %v259 = vsel %vm235, %v251, 0.0
        %v260 = vrot.slane %v259, 4
        %v261 = vadd.f32 %v259, %v260
        %v262 = vrot.slane %v261, 2
        %v263 = vadd.f32 %v261, %v262
        %v264 = vrot.slane %v263, 1
        %v265 = vadd.f32 %v263, %v264
        %v266 = vmul.f32 %v242, 0.25
        %v267 = vmul.f32 %v249, 0.25
        %v268 = vmul.f32 %v258, 0.25
        %v269 = vmul.f32 %v265, 0.25
        %v270 = vmul.f32 %v266, %v266
        %v271 = vmul.f32 %v267, %v267
        %v272 = vsub.f32 %v268, %v270
        %v273 = vsub.f32 %v269, %v271
        %v274 = vmax.f32 %v272, 0.0
        %v275 = vmax.f32 %v273, 0.0
        %v276 = vadd.f32 %v274, 1e-05
        %v277 = vadd.f32 %v275, 1e-05
        %v278 = vrsqrt.pop %v276
        %v279 = vrsqrt.pop %v277
        %v280 = vsub.f32 %v233, %v266
        %v281 = vsub.f32 %v234, %v267
        %v282 = vmul.f32 %v280, %v278
        %v283 = vmul.f32 %v281, %v279
        %v284 = vld [vmem:[%s1] sm:$0xf]
        %286 = vset.pattern.permute.xlu0 0
        %287 = vperm.xlu0 %286, %v284
        %v288 = vpop.permute.xlu0 %287
        %v290 = vmul.f32 %v282, %v288
        %v291 = vmul.f32 %v283, %v288
        %v292 = vld [vmem:[%s2] sm:$0xf]
        %294 = vset.pattern.permute.xlu0 0
        %295 = vperm.xlu0 %294, %v292
        %v296 = vpop.permute.xlu0 %295
        %v298 = vadd.f32 %v290, %v296
        %v299 = vadd.f32 %v291, %v296
        %300 = vst [vmem:[%s230] sm:$0xf] %v298
        %301 = vst [vmem:[%s230 + $0x4] sm:$0xf] %v299
        %s302 = sand.u32 %s106, 1
        %s303 = sand.u32 %s106, 1
        %s304 = smul.addr %s303, 8
        %s305 = scalar_lea.vmem [#allocation3], %s304
        // Predicated region
        $region74: #{layernorm_nchw.1} parent=68 // pred_check
          %p306 = pneg %p116
        $region75: #{layernorm_nchw.1} parent=68 // pred_check_branch
          %308 = sbr.rel (%p306) target = $region77
        $region76: #{layernorm_nchw.1} parent=68 // pred_region
          %s309 = smul.u32 2, %s18
          %s310 = smul.addr %s309, 2
          %s311 = sadd.s32 %s19, %s310
          %s312 = smul.addr %s311, 4
          %s313 = scalar_lea.vmem %s3, %s312
          // Predicated region
          $region78: #{layernorm_nchw.1} parent=76 // pred_check
            _
          $region79: #{layernorm_nchw.1} parent=76 // pred_check_branch
            %315 = sbr.rel (0) target = $region81
          $region80: #{layernorm_nchw.1} parent=76 // pred_region
            // Predicated region
            $region82: #{layernorm_nchw.1} parent=80 // pred_check
              _
            $region83: #{layernorm_nchw.1} parent=80 // pred_check_branch
              %317 = sbr.rel target = $region85
            $region84: #{layernorm_nchw.1} parent=80 // pred_region
              // Predicated region
              $region97: #{layernorm_nchw.1} parent=84 // pred_check
                _
              $region98: #{layernorm_nchw.1} parent=84 // pred_check_branch
                %335 = sbr.rel (0) target = $region100
              $region99: #{layernorm_nchw.1} parent=84 // pred_region
                loop: start=0, step=1, limit=1
                $region101: #{layernorm_nchw.1} parent=99 // loop_pre_header
                  _
                $region102: #{layernorm_nchw.1} parent=99 // loop_header
                  %s337 = sphi 0, %s341
                  %p338 = scmp.ge.s32.totalorder %s337, 1
                  %s342 = sphi %s305, %s305
                  %s343 = sphi %s313, %s313
                $region103: #{layernorm_nchw.1} parent=99 // loop_header_branch
                  %340 = sbr.rel (%p338) target = $region107
                $region104: #{layernorm_nchw.1} parent=99 // loop_body
                  _
                $region105: #{layernorm_nchw.1} parent=99 // loop_footer
                  %s341 = sadd.s32 1, %s337
                $region106: #{layernorm_nchw.1} parent=99 // loop_footer_branch
                  %336 = sbr.rel target = $region102
                $region107: #{layernorm_nchw.1} parent=99 // loop_exit
                  _
                %s345 = ssub.s32 16, 1
                loop: start=0, step=1, limit=1
                $region108: #{layernorm_nchw.1} parent=99 // loop_pre_header
                  _
                $region109: #{layernorm_nchw.1} parent=99 // loop_header
                  %s347 = sphi 0, %s351
                  %p348 = scmp.ge.s32.totalorder %s347, 1
                  %s352 = sphi %s305, %s305
                  %s353 = sphi %s313, %s313
                $region110: #{layernorm_nchw.1} parent=99 // loop_header_branch
                  %350 = sbr.rel (%p348) target = $region114
                $region111: #{layernorm_nchw.1} parent=99 // loop_body
                  %v354 = vld [vmem:[%s352] sm:%s345]
                  %355 = vst [vmem:[%s353] sm:%s345] %v354
                  %v356 = vld [vmem:[%s352 + $0x4] sm:%s345]
                  %357 = vst [vmem:[%s353 + $0x8] sm:%s345] %v356
                $region112: #{layernorm_nchw.1} parent=99 // loop_footer
                  %s351 = sadd.s32 1, %s347
                $region113: #{layernorm_nchw.1} parent=99 // loop_footer_branch
                  %346 = sbr.rel target = $region109
                $region114: #{layernorm_nchw.1} parent=99 // loop_exit
                  _
              $region100: #{layernorm_nchw.1} parent=84 // pred_fallthru
                _
            $region85: #{layernorm_nchw.1} parent=80 // pred_fallthru
              _
            // Predicated region
            $region86: #{layernorm_nchw.1} parent=80 // pred_check
              _
            $region87: #{layernorm_nchw.1} parent=80 // pred_check_branch
              %319 = sbr.rel (0) target = $region89
            $region88: #{layernorm_nchw.1} parent=80 // pred_region
              %s321 = ssub.s32 16, 1
              loop: start=0, step=1, limit=1
              $region90: #{layernorm_nchw.1} parent=88 // loop_pre_header
                _
              $region91: #{layernorm_nchw.1} parent=88 // loop_header
                %s323 = sphi 0, %s327
                %p324 = scmp.ge.s32.totalorder %s323, 1
                %s328 = sphi %s305, %s305
                %s329 = sphi %s313, %s313
              $region92: #{layernorm_nchw.1} parent=88 // loop_header_branch
                %326 = sbr.rel (%p324) target = $region96
              $region93: #{layernorm_nchw.1} parent=88 // loop_body
                %v330 = vld [vmem:[%s328] sm:%s321]
                %331 = vst [vmem:[%s329] sm:%s321] %v330
                %v332 = vld [vmem:[%s328 + $0x4] sm:%s321]
                %333 = vst [vmem:[%s329 + $0x8] sm:%s321] %v332
              $region94: #{layernorm_nchw.1} parent=88 // loop_footer
                %s327 = sadd.s32 1, %s323
              $region95: #{layernorm_nchw.1} parent=88 // loop_footer_branch
                %322 = sbr.rel target = $region91
              $region96: #{layernorm_nchw.1} parent=88 // loop_exit
                _
            $region89: #{layernorm_nchw.1} parent=80 // pred_fallthru
              _
          $region81: #{layernorm_nchw.1} parent=76 // pred_fallthru
            _
          %358 = vnop
        $region77: #{layernorm_nchw.1} parent=68 // pred_fallthru
          _
      $region69: #{layernorm_nchw.1} parent=5 // pred_fallthru
        _
      %p359 = scmp.le.s32.totalorder 2, %s9
      // Predicated region
      $region115: #{layernorm_nchw.1} parent=5 // pred_check
        %p360 = pneg %p359
      $region116: #{layernorm_nchw.1} parent=5 // pred_check_branch
        %362 = sbr.rel (%p360) target = $region118
      $region117: #{layernorm_nchw.1} parent=5 // pred_region
        %s363 = ssub.s32 %s9, 2
        // Predicated region
        $region119: #{layernorm_nchw.1} parent=117 // pred_check
          %p364 = pneg %p122
        $region120: #{layernorm_nchw.1} parent=117 // pred_check_branch
          %366 = sbr.rel (%p364) target = $region122
        $region121: #{layernorm_nchw.1} parent=117 // pred_region
          %s367 = sand.u32 %s107, 1
          %s368 = sand.u32 %s107, 1
          %s369 = smul.addr %s368, 8
          %s370 = scalar_lea.vmem [#allocation3], %s369
        $region122: #{layernorm_nchw.1} parent=117 // pred_fallthru
          _
      $region118: #{layernorm_nchw.1} parent=5 // pred_fallthru
        _
    $region6: #{layernorm_nchw.1} parent=1 // loop_footer
      %s13 = sadd.s32 1, %s9
    $region7: #{layernorm_nchw.1} parent=1 // loop_footer_branch
      %8 = sbr.rel target = $region3
    $region8: #{layernorm_nchw.1} parent=1 // loop_exit
      _

</llo_original>
